<compile_context>
chip_gen: v7x
topology: tpu7x:2x2x1
jax: 0.10.0
libtpu: 0.0.40
codegen_flags: <defaults>
</compile_context>

<pallas_src>
import numpy as np
import jax
import jax.numpy as jnp
from jax.experimental import pallas as pl
from jax.experimental.pallas import tpu as pltpu


def _integral_kernel(x_ref, m_ref, w_ref, o_ref):
    # x_ref: (T, 4*bins)   m_ref: (4*bins, 4*bins)   w_ref: (4*bins, 8)
    # o_ref: (T, 4)
    x = x_ref[...].astype(jnp.float32)                                   # (T, 68)

    # Per-group mean, broadcast back to every bin of its group (one MXU matmul).
    # softmax is shift-invariant per group, so subtracting the mean is exact.
    c = jnp.dot(x, m_ref[...], preferred_element_type=jnp.float32)      # (T, 68)

    # Clamp guards exp overflow only when within-group spread > ~80.
    e = jnp.exp(jnp.minimum(x - c, 80.0))                                # (T, 68)

    w = w_ref[...]
    num = jnp.dot(e, w[:, 0:4], preferred_element_type=jnp.float32)     # (T, 4)
    den = jnp.dot(e, w[:, 4:8], preferred_element_type=jnp.float32)     # (T, 4)

    # Exact divide (den >= 1 always: the group max is >= the group mean).
    o_ref[...] = (num / den).astype(o_ref.dtype)


def _make_constants(reg_max, ne=4):
    bins = reg_max + 1
    cols = ne * bins
    gid = np.arange(cols) // bins                       # group id of each bin column
    val = (np.arange(cols) % bins).astype(np.float32)   # 0..reg_max within each group

    # Block-diagonal "group mean" matrix: M[i, j] = 1/bins if same group else 0.
    m = np.where(gid[:, None] == gid[None, :], 1.0 / bins, 0.0).astype(np.float32)

    # W[:, k]   = projection weights of group k   (k = 0..3)
    # W[:, 4+k] = ones of group k
    w = np.zeros((cols, 2 * ne), dtype=np.float32)
    w[np.arange(cols), gid] = val
    w[np.arange(cols), ne + gid] = 1.0
    return jnp.asarray(m), jnp.asarray(w)


def integral_forward(x, reg_max=16, max_tile_rows=4096):
    """x: (b, nb, 4*(reg_max+1)) -> (b, nb, 4)"""
    b, nb, last = x.shape
    ne = 4
    bins = reg_max + 1
    cols = ne * bins
    assert last == cols, f"expected last dim {cols}, got {last}"

    n = b * nb
    x2 = x.reshape(n, cols)                 # free reshape: no transpose, no pad

    m_const, w_const = _make_constants(reg_max, ne)

    # Tile: multiple of 8 sublanes; capped for VMEM; >= 2 grid steps when
    # possible so both v7x TensorCores get work.
    half = -(-n // 2)
    tile = min(max_tile_rows, max(8, ((half + 7) // 8) * 8))
    grid = (pl.cdiv(n, tile),)

    out2 = pl.pallas_call(
        _integral_kernel,
        out_shape=jax.ShapeDtypeStruct((n, ne), x.dtype),
        grid_spec=pltpu.PrefetchScalarGridSpec(
            num_scalar_prefetch=0,
            grid=grid,
            in_specs=[
                pl.BlockSpec((tile, cols), lambda i: (i, 0)),
                pl.BlockSpec((cols, cols), lambda i: (0, 0)),      # M (resident)
                pl.BlockSpec((cols, 2 * ne), lambda i: (0, 0)),    # W (resident)
            ],
            out_specs=pl.BlockSpec((tile, ne), lambda i: (i, 0)),
        ),
        compiler_params=pltpu.CompilerParams(
            dimension_semantics=("parallel",),
            vmem_limit_bytes=32 * 1024 * 1024,
        ),
    )(x2, m_const, w_const)

    return out2.reshape(b, nb, ne)


def _reference(x, reg_max=16):
    b, nb, _ = x.shape
    bins = reg_max + 1
    xr = x.reshape(b, nb, 4, bins).astype(jnp.float32)
    p = jax.nn.softmax(xr, axis=-1)
    proj = jnp.arange(bins, dtype=jnp.float32)
    return jnp.einsum("bnek,k->bne", p, proj).astype(x.dtype)


if __name__ == "__main__":
    reg_max = 16
    key = jax.random.PRNGKey(0)

    # Primary check: evenly tiled, 2 parallel grid steps.
    b, nb = 2, 128
    x = jax.random.normal(key, (b, nb, 4 * (reg_max + 1)), dtype=jnp.float32)
    out = jax.block_until_ready(integral_forward(x, reg_max=reg_max))
    ref = _reference(x, reg_max=reg_max)
    assert out.shape == (b, nb, 4), out.shape
    err = float(jnp.max(jnp.abs(out - ref)))
    assert jnp.allclose(out, ref, atol=1e-5, rtol=1e-5), err

    # Secondary check: ragged row count -> exercises masked last-block writeback.
    b2, nb2 = 2, 97
    x_r = jax.random.normal(jax.random.PRNGKey(1), (b2, nb2, 4 * (reg_max + 1)),
                            dtype=jnp.float32)
    out_r = jax.block_until_ready(integral_forward(x_r, reg_max=reg_max))
    ref_r = _reference(x_r, reg_max=reg_max)
    err_r = float(jnp.max(jnp.abs(out_r - ref_r)))
    assert jnp.allclose(out_r, ref_r, atol=1e-5, rtol=1e-5), err_r

    print("KERNEL_OK")
</pallas_src>

<mosaic_0001>
module attributes {stable_mosaic.version = 11 : i64} {
  func.func @_integral_kernel(%arg0: i32, %arg1: memref<128x68xf32, #tpu.memory_space<vmem>>, %arg2: memref<68x68xf32, #tpu.memory_space<vmem>>, %arg3: memref<68x8xf32, #tpu.memory_space<vmem>>, %arg4: memref<128x4xf32, #tpu.memory_space<vmem>>) attributes {dimension_semantics = [#tpu.dimension_semantics<parallel>], iteration_bounds = array<i64: 2>, scalar_prefetch = 0 : i64, scratch_operands = 0 : i64, tpu.core_type = #tpu.core_type<tc>, window_params = [{transform_indices = @transform_0, window_bounds = array<i64: 128, 68>}, {pipeline_mode = #tpu.pipeline_mode<synchronous>, transform_indices = @transform_1, window_bounds = array<i64: 68, 68>}, {pipeline_mode = #tpu.pipeline_mode<synchronous>, transform_indices = @transform_2, window_bounds = array<i64: 68, 8>}, {transform_indices = @transform_3, window_bounds = array<i64: 128, 4>}]} {
    %c0 = arith.constant 0 : index
    %c0_0 = arith.constant 0 : index
    %0 = vector.load %arg1[%c0, %c0_0] : memref<128x68xf32, #tpu.memory_space<vmem>>, vector<128x68xf32>
    %c0_1 = arith.constant 0 : index
    %c0_2 = arith.constant 0 : index
    %1 = vector.load %arg2[%c0_1, %c0_2] : memref<68x68xf32, #tpu.memory_space<vmem>>, vector<68x68xf32>
    %cst = arith.constant dense<0.000000e+00> : vector<128x68xf32>
    %2 = tpu.matmul %0, %1, %cst {dimension_numbers = #tpu.dot_dimension_numbers<[1], [0], [0], [1], [0, 0, 1, 1], [], []>} : vector<128x68xf32>, vector<68x68xf32>, vector<128x68xf32> -> vector<128x68xf32>
    %3 = arith.subf %0, %2 : vector<128x68xf32>
    %cst_3 = arith.constant 8.000000e+01 : f32
    %4 = vector.broadcast %cst_3 : f32 to vector<128x68xf32>
    %5 = arith.minimumf %3, %4 : vector<128x68xf32>
    %6 = math.exp %5 : vector<128x68xf32>
    %c0_4 = arith.constant 0 : index
    %c0_5 = arith.constant 0 : index
    %7 = vector.load %arg3[%c0_4, %c0_5] : memref<68x8xf32, #tpu.memory_space<vmem>>, vector<68x8xf32>
    %8 = vector.extract_strided_slice %7 {offsets = [0, 0], sizes = [68, 4], strides = [1, 1]} : vector<68x8xf32> to vector<68x4xf32>
    %cst_6 = arith.constant dense<0.000000e+00> : vector<128x4xf32>
    %9 = tpu.matmul %6, %8, %cst_6 {dimension_numbers = #tpu.dot_dimension_numbers<[1], [0], [0], [1], [0, 0, 1, 1], [], []>} : vector<128x68xf32>, vector<68x4xf32>, vector<128x4xf32> -> vector<128x4xf32>
    %10 = vector.extract_strided_slice %7 {offsets = [0, 4], sizes = [68, 4], strides = [1, 1]} : vector<68x8xf32> to vector<68x4xf32>
    %cst_7 = arith.constant dense<0.000000e+00> : vector<128x4xf32>
    %11 = tpu.matmul %6, %10, %cst_7 {dimension_numbers = #tpu.dot_dimension_numbers<[1], [0], [0], [1], [0, 0, 1, 1], [], []>} : vector<128x68xf32>, vector<68x4xf32>, vector<128x4xf32> -> vector<128x4xf32>
    %12 = arith.divf %9, %11 : vector<128x4xf32>
    %c0_8 = arith.constant 0 : index
    %c0_9 = arith.constant 0 : index
    %13 = vector.load %arg4[%c0_8, %c0_9] : memref<128x4xf32, #tpu.memory_space<vmem>>, vector<128x4xf32>
    tpu.vector_store %arg4[%c0_8, %c0_9], %12 {strides = array<i32>} : memref<128x4xf32, #tpu.memory_space<vmem>>, vector<128x4xf32>,
    return
  }
  func.func @transform_0(%arg0: i32) -> (i32, i32) {
    %c0_i32 = arith.constant 0 : i32
    %c0_i32_0 = arith.constant 0 : i32
    return %arg0, %c0_i32 : i32, i32
  }
  func.func @transform_1(%arg0: i32) -> (i32, i32) {
    %c0_i32 = arith.constant 0 : i32
    %c0_i32_0 = arith.constant 0 : i32
    %c0_i32_1 = arith.constant 0 : i32
    return %c0_i32, %c0_i32_0 : i32, i32
  }
  func.func @transform_2(%arg0: i32) -> (i32, i32) {
    %c0_i32 = arith.constant 0 : i32
    %c0_i32_0 = arith.constant 0 : i32
    %c0_i32_1 = arith.constant 0 : i32
    return %c0_i32, %c0_i32_0 : i32, i32
  }
  func.func @transform_3(%arg0: i32) -> (i32, i32) {
    %c0_i32 = arith.constant 0 : i32
    %c0_i32_0 = arith.constant 0 : i32
    return %arg0, %c0_i32 : i32, i32
  }
}

</mosaic_0001>

<llo_original>
// kernel: tpu_custom_call.1
$region0: #{tpu_custom_call.1}
  #allocation0 [shape = 'u32[]', space=smem, size = 0x4, offset = 0x4, fixed_abs, tag = 'smem constant byte address 0x4 - core index']
  #allocation1 [shape = 'u32[144,128]{1,0:T(1,128)}', space=vmem, size = 0x12000, scoped, tag = 'internal scratch']
  %s0 = inlined_call_operand.vmem [shape: f32[256,68], index: 0, kind: input, shape index: {}]
  %s1 = inlined_call_operand.vmem [shape: f32[68,68], index: 1, kind: input, shape index: {}]
  %s2 = inlined_call_operand.vmem [shape: f32[68,8], index: 2, kind: input, shape index: {}]
  %s3 = inlined_call_operand.vmem [shape: f32[256,4], index: 3, kind: output, shape index: {}]
  %s4 = sld [smem:[#allocation0]]
  $region45: #{tpu_custom_call.1} parent=0
    _
  %s6 = ssub.s32 1, %s4
  %s7 = scalar_select 0, %s6, %s4
  loop: start=0, step=1, limit=4
  $region2: #{tpu_custom_call.1} parent=0 // loop_pre_header
    _
  $region3: #{tpu_custom_call.1} parent=0 // loop_header
    %s9 = sphi 0, %s13
    %p10 = scmp.ge.s32.totalorder %s9, 4
    %s19 = sphi 0, %s21
    %s22 = sphi 0, %s19
    %s23 = sphi 0, %s22
    %s39 = sphi 0, %s23
    %s43 = sphi 0, %s43
    %s45 = sphi 0, %s43
    %s46 = sphi 0, %s45
    %s60 = sphi 0, %s46
    %s64 = sphi 0, %s64
    %s66 = sphi 0, %s64
    %s67 = sphi 0, %s66
    %s81 = sphi 0, %s67
    %s87 = sphi 0, %s89
    %s90 = sphi 0, %s87
    %s91 = sphi 0, %s90
    %s107 = sphi 0, %s91
  $region4: #{tpu_custom_call.1} parent=0 // loop_header_branch
    %12 = sbr.rel (%p10) target = $region8
  $region5: #{tpu_custom_call.1} parent=0 // loop_body
    %s14 = ssub.s32 %s9, 1
    %s15 = ssub.s32 %s9, 2
    %s16 = sadd.s32 %s9, 1
    %s17 = ssub.s32 %s9, %s16
    %p18 = scmp.eq.s32.totalorder %s17, 0
    %s20 = sadd.s32 %s19, 1
    %s21 = scalar_select %p18, %s19, %s20
    %p24 = pneg %p18
    %p25 = scmp.eq.s32.totalorder %s9, 1
    %p26 = por %p24, %p25
    %p27 = scmp.ne.s32.totalorder %s19, %s22
    %p28 = scmp.eq.s32.totalorder %s9, 0
    %p29 = por %p27, %p28
    %p30 = scmp.ne.s32.totalorder %s19, %s22
    %p31 = scmp.eq.s32.totalorder %s14, 1
    %p32 = por %p30, %p31
    %p33 = scmp.ne.s32.totalorder %s22, %s23
    %p34 = scmp.eq.s32.totalorder %s14, 0
    %p35 = por %p33, %p34
    %p36 = scmp.ne.s32.totalorder %s22, %s23
    %p37 = scmp.eq.s32.totalorder %s15, 1
    %p38 = por %p36, %p37
    %p40 = scmp.ne.s32.totalorder %s23, %s39
    %p41 = scmp.eq.s32.totalorder %s15, 0
    %p42 = por %p40, %p41
    %s44 = sadd.s32 %s43, 1
    %p47 = scmp.eq.s32.totalorder %s9, 1
    %p48 = scmp.ne.s32.totalorder %s43, %s45
    %p49 = scmp.eq.s32.totalorder %s9, 0
    %p50 = por %p48, %p49
    %p51 = scmp.ne.s32.totalorder %s43, %s45
    %p52 = scmp.eq.s32.totalorder %s14, 1
    %p53 = por %p51, %p52
    %p54 = scmp.ne.s32.totalorder %s45, %s46
    %p55 = scmp.eq.s32.totalorder %s14, 0
    %p56 = por %p54, %p55
    %p57 = scmp.ne.s32.totalorder %s45, %s46
    %p58 = scmp.eq.s32.totalorder %s15, 1
    %p59 = por %p57, %p58
    %p61 = scmp.ne.s32.totalorder %s46, %s60
    %p62 = scmp.eq.s32.totalorder %s15, 0
    %p63 = por %p61, %p62
    %s65 = sadd.s32 %s64, 1
    %p68 = scmp.eq.s32.totalorder %s9, 1
    %p69 = scmp.ne.s32.totalorder %s64, %s66
    %p70 = scmp.eq.s32.totalorder %s9, 0
    %p71 = por %p69, %p70
    %p72 = scmp.ne.s32.totalorder %s64, %s66
    %p73 = scmp.eq.s32.totalorder %s14, 1
    %p74 = por %p72, %p73
    %p75 = scmp.ne.s32.totalorder %s66, %s67
    %p76 = scmp.eq.s32.totalorder %s14, 0
    %p77 = por %p75, %p76
    %p78 = scmp.ne.s32.totalorder %s66, %s67
    %p79 = scmp.eq.s32.totalorder %s15, 1
    %p80 = por %p78, %p79
    %p82 = scmp.ne.s32.totalorder %s67, %s81
    %p83 = scmp.eq.s32.totalorder %s15, 0
    %p84 = por %p82, %p83
    %s85 = ssub.s32 %s9, %s16
    %p86 = scmp.eq.s32.totalorder %s85, 0
    %s88 = sadd.s32 %s87, 1
    %s89 = scalar_select %p86, %s87, %s88
    %p92 = pneg %p86
    %p93 = scmp.eq.s32.totalorder %s9, 1
    %p94 = por %p92, %p93
    %p95 = scmp.ne.s32.totalorder %s87, %s90
    %p96 = scmp.eq.s32.totalorder %s9, 0
    %p97 = por %p95, %p96
    %p98 = scmp.ne.s32.totalorder %s87, %s90
    %p99 = scmp.eq.s32.totalorder %s14, 1
    %p100 = por %p98, %p99
    %p101 = scmp.ne.s32.totalorder %s90, %s91
    %p102 = scmp.eq.s32.totalorder %s14, 0
    %p103 = por %p101, %p102
    %p104 = scmp.ne.s32.totalorder %s90, %s91
    %p105 = scmp.eq.s32.totalorder %s15, 1
    %p106 = por %p104, %p105
    %p108 = scmp.ne.s32.totalorder %s91, %s107
    %p109 = scmp.eq.s32.totalorder %s15, 0
    %p110 = por %p108, %p109
    %p111 = scmp.le.s32.totalorder 1, %s9
    %p112 = scmp.lt.s32.totalorder %s9, 3
    %p113 = pnand %p111, %p112
    %p114 = pneg %p113
    // Predicated region
    $region9: #{tpu_custom_call.1} parent=5 // pred_check
      _
    $region10: #{tpu_custom_call.1} parent=5 // pred_check_branch
      %116 = sbr.rel (%p113) target = $region12
    $region11: #{tpu_custom_call.1} parent=5 // pred_region
      %s117 = ssub.s32 %s9, 1
      // Predicated region
      $region13: #{tpu_custom_call.1} parent=11 // pred_check
        %p118 = pneg %p56
      $region14: #{tpu_custom_call.1} parent=11 // pred_check_branch
        %120 = sbr.rel (%p118) target = $region16
      $region15: #{tpu_custom_call.1} parent=11 // pred_region
        _
      $region16: #{tpu_custom_call.1} parent=11 // pred_fallthru
        _
      // Predicated region
      $region17: #{tpu_custom_call.1} parent=11 // pred_check
        %p121 = pneg %p77
      $region18: #{tpu_custom_call.1} parent=11 // pred_check_branch
        %123 = sbr.rel (%p121) target = $region20
      $region19: #{tpu_custom_call.1} parent=11 // pred_region
        _
      $region20: #{tpu_custom_call.1} parent=11 // pred_fallthru
        _
    $region12: #{tpu_custom_call.1} parent=5 // pred_fallthru
      _
    %p124 = scmp.lt.s32.totalorder %s9, 2
    // Predicated region
    $region21: #{tpu_custom_call.1} parent=5 // pred_check
      %p125 = pneg %p124
    $region22: #{tpu_custom_call.1} parent=5 // pred_check_branch
      %127 = sbr.rel (%p125) target = $region24
    $region23: #{tpu_custom_call.1} parent=5 // pred_region
      // Predicated region
      $region25: #{tpu_custom_call.1} parent=23 // pred_check
        %p128 = pneg %p29
      $region26: #{tpu_custom_call.1} parent=23 // pred_check_branch
        %130 = sbr.rel (%p128) target = $region28
      $region27: #{tpu_custom_call.1} parent=23 // pred_region
        %s131 = smul.u32 16, %s9
        %p132 = scmp.lt.s32.totalorder %s131, 31
        %s133 = scalar_select %p132, %s131, 31
        %s134 = smul.addr %s133, 8
        %s135 = scalar_lea.vmem %s0, %s134
        %s136 = smul.u32 16, %s9
      $region28: #{tpu_custom_call.1} parent=23 // pred_fallthru
        _
    $region24: #{tpu_custom_call.1} parent=5 // pred_fallthru
      _
    %p137 = scmp.le.s32.totalorder 1, %s9
    %p138 = scmp.lt.s32.totalorder %s9, 3
    %p139 = pnand %p137, %p138
    %p140 = pneg %p139
    // Predicated region
    $region29: #{tpu_custom_call.1} parent=5 // pred_check
      _
    $region30: #{tpu_custom_call.1} parent=5 // pred_check_branch
      %142 = sbr.rel (%p139) target = $region32
    $region31: #{tpu_custom_call.1} parent=5 // pred_region
      %s143 = ssub.s32 %s9, 1
      %s144 = smul.u32 16, %s14
      %p145 = scmp.lt.s32.totalorder %s144, 31
      %s146 = scalar_select %p145, %s144, 31
      %s147 = smul.addr %s146, 8
      %s148 = scalar_lea.vmem %s0, %s147
      %p149 = pneg %p35
      %p150 = pneg %p32
      %p151 = pneg %p56
      %p152 = pneg %p53
      %p153 = pneg %p77
      %p154 = pneg %p74
      %p155 = pneg %p103
      %p156 = pneg %p100
      %s157 = smul.u32 16, %s14
      %p158 = scmp.lt.s32.totalorder %s157, 31
      %s159 = scalar_select %p158, %s157, 31
      %s160 = smul.addr %s159, 8
      %s161 = scalar_lea.vmem %s3, %s160
      %s162 = smul.u32 16, %s14
      %p163 = scmp.lt.s32.totalorder %s162, 31
      %s164 = scalar_select %p163, %s162, 31
      %s165 = smul.addr %s164, 8
      %s166 = scalar_lea.vmem %s0, %s165
      %s167 = smul.u32 16, %s14
      %s168 = smul.u32 16, %s14
      %p169 = scmp.lt.s32.totalorder %s168, 31
      %s170 = scalar_select %p169, %s168, 31
      %s171 = smul.addr %s170, 8
      %s172 = scalar_lea.vmem %s3, %s171
      %s173 = smul.u32 16, %s14
      %v174 = vld [vmem:[%s166] sm:$0xff]
      %v175 = vld [vmem:[%s166 + $0x8] sm:$0xff]
      %v176 = vld [vmem:[%s166 + $0x10] sm:$0xff]
      %v177 = vld [vmem:[%s166 + $0x18] sm:$0xff]
      %v178 = vld [vmem:[%s166 + $0x20] sm:$0xff]
      %v179 = vld [vmem:[%s166 + $0x28] sm:$0xff]
      %v180 = vld [vmem:[%s166 + $0x30] sm:$0xff]
      %v181 = vld [vmem:[%s166 + $0x38] sm:$0xff]
      %v182 = vld [vmem:[%s166 + $0x40] sm:$0xff]
      %v183 = vld [vmem:[%s166 + $0x48] sm:$0xff]
      %v184 = vld [vmem:[%s166 + $0x50] sm:$0xff]
      %v185 = vld [vmem:[%s166 + $0x58] sm:$0xff]
      %v186 = vld [vmem:[%s166 + $0x60] sm:$0xff]
      %v187 = vld [vmem:[%s166 + $0x68] sm:$0xff]
      %v188 = vld [vmem:[%s166 + $0x70] sm:$0xff]
      %v189 = vld [vmem:[%s166 + $0x78] sm:$0xff]
      %v190 = vld [vmem:[%s1] sm:$0xff]
      %v191 = vld [vmem:[%s1 + $0x8] sm:$0xff]
      %v192 = vld [vmem:[%s1 + $0x10] sm:$0xff]
      %v193 = vld [vmem:[%s1 + $0x18] sm:$0xff]
      %v194 = vld [vmem:[%s1 + $0x20] sm:$0xff]
      %v195 = vld [vmem:[%s1 + $0x28] sm:$0xff]
      %v196 = vld [vmem:[%s1 + $0x30] sm:$0xff]
      %v197 = vld [vmem:[%s1 + $0x38] sm:$0xff]
      %v198 = vld [vmem:[%s1 + $0x40] sm:$0xf]
      %vm199 = vcmask 556032
      %v201 = vsel %vm199, %v174, 0
      %v204 = vsel %vm199, %v175, 0
      %v207 = vsel %vm199, %v176, 0
      %v210 = vsel %vm199, %v177, 0
      %v213 = vsel %vm199, %v178, 0
      %v216 = vsel %vm199, %v179, 0
      %v219 = vsel %vm199, %v180, 0
      %v222 = vsel %vm199, %v181, 0
      %v225 = vsel %vm199, %v182, 0
      %v228 = vsel %vm199, %v183, 0
      %v231 = vsel %vm199, %v184, 0
      %v234 = vsel %vm199, %v185, 0
      %v237 = vsel %vm199, %v186, 0
      %v240 = vsel %vm199, %v187, 0
      %v243 = vsel %vm199, %v188, 0
      %v246 = vsel %vm199, %v189, 0
      %vm248 = vcmask 1043456
      %v250 = vsel %vm248, %v198, 0
      %252 = vmatprep.subr.mxu0 0.0
      %253 = vmatpush1.msra.mxu0 %v190
      %254 = vmatprep.subr.mxu0 0.0
      %255 = vmatpush1.msra.mxu0 %v191
      %256 = vmatprep.subr.mxu0 0.0
      %257 = vmatpush1.msra.mxu0 %v192
      %258 = vmatprep.subr.mxu0 0.0
      %259 = vmatpush1.msra.mxu0 %v193
      %260 = vmatprep.subr.mxu0 0.0
      %261 = vmatpush1.msra.mxu0 %v194
      %262 = vmatprep.subr.mxu0 0.0
      %263 = vmatpush1.msra.mxu0 %v195
      %264 = vmatprep.subr.mxu0 0.0
      %265 = vmatpush1.msra.mxu0 %v196
      %266 = vmatprep.subr.mxu0 0.0
      %267 = vmatpush1.msra.mxu0 %v197
      %268 = vmatprep.subr.mxu0 0.0
      %269 = vmatpush1.msra.mxu0 %v250
      %270 = vmatprep.subr.mxu0 0.0
      %271 = vmatpush1.msra.mxu0 0.0
      %272 = vmatprep.subr.mxu0 0.0
      %273 = vmatpush1.msra.mxu0 0.0
      %274 = vmatprep.subr.mxu0 0.0
      %275 = vmatpush1.msra.mxu0 0.0
      %276 = vmatprep.subr.mxu0 0.0
      %277 = vmatpush1.msra.mxu0 0.0
      %278 = vmatprep.subr.mxu0 0.0
      %279 = vmatpush1.msra.mxu0 0.0
      %280 = vmatprep.subr.mxu0 0.0
      %281 = vmatpush1.msra.mxu0 0.0
      %282 = vmatprep.subr.mxu0 0.0
      %283 = vmatpush1.msra.mxu0 0.0
      %284 = vmatprep.subr.mxu0 0.0
      %285 = vmatpush1.msra.mxu0 0.0
      %286 = vmatprep.subr.mxu0 0.0
      %287 = vmatpush1.msra.mxu0 0.0
      %288 = vmatprep.subr.mxu0 0.0
      %289 = vmatpush1.msra.mxu0 0.0
      %290 = vmatprep.subr.mxu0 0.0
      %291 = vmatpush1.msra.mxu0 0.0
      %292 = vmatprep.subr.mxu0 0.0
      %293 = vmatpush1.msra.mxu0 0.0
      %294 = vmatprep.subr.mxu0 0.0
      %295 = vmatpush1.msra.mxu0 0.0
      %296 = vmatprep.subr.mxu0 0.0
      %297 = vmatpush1.msra.mxu0 0.0
      %298 = vmatprep.subr.mxu0 0.0
      %299 = vmatpush1.msra.mxu0 0.0
      %300 = vmatprep.subr.mxu0 0.0
      %301 = vmatpush1.msra.mxu0 0.0
      %302 = vmatprep.subr.mxu0 0.0
      %303 = vmatpush1.msra.mxu0 0.0
      %304 = vmatprep.subr.mxu0 0.0
      %305 = vmatpush1.msra.mxu0 0.0
      %306 = vmatprep.subr.mxu0 0.0
      %307 = vmatpush1.msra.mxu0 0.0
      %308 = vmatprep.subr.mxu0 0.0
      %309 = vmatpush1.msra.mxu0 0.0
      %310 = vmatprep.subr.mxu0 0.0
      %311 = vmatpush1.msra.mxu0 0.0
      %312 = vmatprep.subr.mxu0 0.0
      %313 = vmatpush1.msra.mxu0 0.0
      %314 = vmatprep.subr.mxu0 0.0
      %315 = vmatpush1.msra.mxu0 0.0
      %316 = vmatprep.mubr.f32.mxu0 0.0
      %317 = vmatmul.mubr.f32.gmra.mrb[0].mxu0 %v201
      %v318 = vpop.f32.mrb[0].mxu0
      %v319 = vadd.f32 0.0, %v318
      %v320 = vpop.f32.mrb[0].mxu0
      %321 = vmatprep.mubr.f32.mxu0 0.0
      %322 = vmatmul.mubr.f32.gmra.mrb[0].mxu0 %v204
      %v323 = vpop.f32.mrb[0].mxu0
      %v324 = vadd.f32 0.0, %v323
      %v325 = vpop.f32.mrb[0].mxu0
      %326 = vmatprep.mubr.f32.mxu0 0.0
      %327 = vmatmul.mubr.f32.gmra.mrb[0].mxu0 %v207
      %v328 = vpop.f32.mrb[0].mxu0
      %v329 = vadd.f32 0.0, %v328
      %v330 = vpop.f32.mrb[0].mxu0
      %331 = vmatprep.mubr.f32.mxu0 0.0
      %332 = vmatmul.mubr.f32.gmra.mrb[0].mxu0 %v210
      %v333 = vpop.f32.mrb[0].mxu0
      %v334 = vadd.f32 0.0, %v333
      %v335 = vpop.f32.mrb[0].mxu0
      %336 = vmatprep.mubr.f32.mxu0 0.0
      %337 = vmatmul.mubr.f32.gmra.mrb[0].mxu0 %v213
      %v338 = vpop.f32.mrb[0].mxu0
      %v339 = vadd.f32 0.0, %v338
      %v340 = vpop.f32.mrb[0].mxu0
      %341 = vmatprep.mubr.f32.mxu0 0.0
      %342 = vmatmul.mubr.f32.gmra.mrb[0].mxu0 %v216
      %v343 = vpop.f32.mrb[0].mxu0
      %v344 = vadd.f32 0.0, %v343
      %v345 = vpop.f32.mrb[0].mxu0
      %346 = vmatprep.mubr.f32.mxu0 0.0
      %347 = vmatmul.mubr.f32.gmra.mrb[0].mxu0 %v219
      %v348 = vpop.f32.mrb[0].mxu0
      %v349 = vadd.f32 0.0, %v348
      %v350 = vpop.f32.mrb[0].mxu0
      %351 = vmatprep.mubr.f32.mxu0 0.0
      %352 = vmatmul.mubr.f32.gmra.mrb[0].mxu0 %v222
      %v353 = vpop.f32.mrb[0].mxu0
      %v354 = vadd.f32 0.0, %v353
      %v355 = vpop.f32.mrb[0].mxu0
      %356 = vmatprep.mubr.f32.mxu0 0.0
      %357 = vmatmul.mubr.f32.gmra.mrb[0].mxu0 %v225
      %v358 = vpop.f32.mrb[0].mxu0
      %v359 = vadd.f32 0.0, %v358
      %v360 = vpop.f32.mrb[0].mxu0
      %361 = vmatprep.mubr.f32.mxu0 0.0
      %362 = vmatmul.mubr.f32.gmra.mrb[0].mxu0 %v228
      %v363 = vpop.f32.mrb[0].mxu0
      %v364 = vadd.f32 0.0, %v363
      %v365 = vpop.f32.mrb[0].mxu0
      %366 = vmatprep.mubr.f32.mxu0 0.0
      %367 = vmatmul.mubr.f32.gmra.mrb[0].mxu0 %v231
      %v368 = vpop.f32.mrb[0].mxu0
      %v369 = vadd.f32 0.0, %v368
      %v370 = vpop.f32.mrb[0].mxu0
      %371 = vmatprep.mubr.f32.mxu0 0.0
      %372 = vmatmul.mubr.f32.gmra.mrb[0].mxu0 %v234
      %v373 = vpop.f32.mrb[0].mxu0
      %v374 = vadd.f32 0.0, %v373
      %v375 = vpop.f32.mrb[0].mxu0
      %376 = vmatprep.mubr.f32.mxu0 0.0
      %377 = vmatmul.mubr.f32.gmra.mrb[0].mxu0 %v237
      %v378 = vpop.f32.mrb[0].mxu0
      %v379 = vadd.f32 0.0, %v378
      %v380 = vpop.f32.mrb[0].mxu0
      %381 = vmatprep.mubr.f32.mxu0 0.0
      %382 = vmatmul.mubr.f32.gmra.mrb[0].mxu0 %v240
      %v383 = vpop.f32.mrb[0].mxu0
      %v384 = vadd.f32 0.0, %v383
      %v385 = vpop.f32.mrb[0].mxu0
      %386 = vmatprep.mubr.f32.mxu0 0.0
      %387 = vmatmul.mubr.f32.gmra.mrb[0].mxu0 %v243
      %v388 = vpop.f32.mrb[0].mxu0
      %v389 = vadd.f32 0.0, %v388
      %v390 = vpop.f32.mrb[0].mxu0
      %391 = vmatprep.mubr.f32.mxu0 0.0
      %392 = vmatmul.mubr.f32.gmra.mrb[0].mxu0 %v246
      %v393 = vpop.f32.mrb[0].mxu0
      %v394 = vadd.f32 0.0, %v393
      %v395 = vpop.f32.mrb[0].mxu0
      %396 = vdwg.mxu0
      %v397 = vsub.f32 %v174, %v319
      %v398 = vsub.f32 %v175, %v324
      %v399 = vsub.f32 %v176, %v329
      %v400 = vsub.f32 %v177, %v334
      %v401 = vsub.f32 %v178, %v339
      %v402 = vsub.f32 %v179, %v344
      %v403 = vsub.f32 %v180, %v349
      %v404 = vsub.f32 %v181, %v354
      %v405 = vsub.f32 %v182, %v359
      %v406 = vsub.f32 %v183, %v364
      %v407 = vsub.f32 %v184, %v369
      %v408 = vsub.f32 %v185, %v374
      %v409 = vsub.f32 %v186, %v379
      %v410 = vsub.f32 %v187, %v384
      %v411 = vsub.f32 %v188, %v389
      %v412 = vsub.f32 %v189, %v394
      %v413 = vmin.f32 %v397, 80.0
      %v414 = vmin.f32 %v398, 80.0
      %v415 = vmin.f32 %v399, 80.0
      %v416 = vmin.f32 %v400, 80.0
      %v417 = vmin.f32 %v401, 80.0
      %v418 = vmin.f32 %v402, 80.0
      %v419 = vmin.f32 %v403, 80.0
      %v420 = vmin.f32 %v404, 80.0
      %v421 = vmin.f32 %v405, 80.0
      %v422 = vmin.f32 %v406, 80.0
      %v423 = vmin.f32 %v407, 80.0
      %v424 = vmin.f32 %v408, 80.0
      %v425 = vmin.f32 %v409, 80.0
      %v426 = vmin.f32 %v410, 80.0
      %v427 = vmin.f32 %v411, 80.0
      %v428 = vmin.f32 %v412, 80.0
      %v429 = vmul.f32 %v413, 1.442695
      %v430 = vpow.pop %v429
      %v431 = vmul.f32 %v414, 1.442695
      %v432 = vpow.pop %v431
      %v433 = vmul.f32 %v415, 1.442695
      %v434 = vpow.pop %v433
      %v435 = vmul.f32 %v416, 1.442695
      %v436 = vpow.pop %v435
      %v437 = vmul.f32 %v417, 1.442695
      %v438 = vpow.pop %v437
      %v439 = vmul.f32 %v418, 1.442695
      %v440 = vpow.pop %v439
      %v441 = vmul.f32 %v419, 1.442695
      %v442 = vpow.pop %v441
      %v443 = vmul.f32 %v420, 1.442695
      %v444 = vpow.pop %v443
      %v445 = vmul.f32 %v421, 1.442695
      %v446 = vpow.pop %v445
      %v447 = vmul.f32 %v422, 1.442695
      %v448 = vpow.pop %v447
      %v449 = vmul.f32 %v423, 1.442695
      %v450 = vpow.pop %v449
      %v451 = vmul.f32 %v424, 1.442695
      %v452 = vpow.pop %v451
      %v453 = vmul.f32 %v425, 1.442695
      %v454 = vpow.pop %v453
      %v455 = vmul.f32 %v426, 1.442695
      %v456 = vpow.pop %v455
      %v457 = vmul.f32 %v427, 1.442695
      %v458 = vpow.pop %v457
      %v459 = vmul.f32 %v428, 1.442695
      %v460 = vpow.pop %v459
      %v461 = vld [vmem:[%s2] sm:$0xff]
      %v462 = vld [vmem:[%s2 + $0x8] sm:$0xff]
      %v463 = vld [vmem:[%s2 + $0x10] sm:$0xff]
      %v464 = vld [vmem:[%s2 + $0x18] sm:$0xff]
      %v465 = vld [vmem:[%s2 + $0x20] sm:$0xff]
      %v466 = vld [vmem:[%s2 + $0x28] sm:$0xff]
      %v467 = vld [vmem:[%s2 + $0x30] sm:$0xff]
      %v468 = vld [vmem:[%s2 + $0x38] sm:$0xff]
      %v469 = vld [vmem:[%s2 + $0x40] sm:$0xf]
      %v471 = vsel %vm199, %v430, 0
      %v474 = vsel %vm199, %v432, 0
      %v477 = vsel %vm199, %v434, 0
      %v480 = vsel %vm199, %v436, 0
      %v483 = vsel %vm199, %v438, 0
      %v486 = vsel %vm199, %v440, 0
      %v489 = vsel %vm199, %v442, 0
      %v492 = vsel %vm199, %v444, 0
      %v495 = vsel %vm199, %v446, 0
      %v498 = vsel %vm199, %v448, 0
      %v501 = vsel %vm199, %v450, 0
      %v504 = vsel %vm199, %v452, 0
      %v507 = vsel %vm199, %v454, 0
      %v510 = vsel %vm199, %v456, 0
      %v513 = vsel %vm199, %v458, 0
      %v516 = vsel %vm199, %v460, 0
      %v519 = vsel %vm248, %v469, 0
      %521 = vmatprep.subr.mxu0 0.0
      %522 = vmatpush1.msra.mxu0 %v461
      %523 = vmatprep.subr.mxu0 0.0
      %524 = vmatpush1.msra.mxu0 %v462
      %525 = vmatprep.subr.mxu0 0.0
      %526 = vmatpush1.msra.mxu0 %v463
      %527 = vmatprep.subr.mxu0 0.0
      %528 = vmatpush1.msra.mxu0 %v464
      %529 = vmatprep.subr.mxu0 0.0
      %530 = vmatpush1.msra.mxu0 %v465
      %531 = vmatprep.subr.mxu0 0.0
      %532 = vmatpush1.msra.mxu0 %v466
      %533 = vmatprep.subr.mxu0 0.0
      %534 = vmatpush1.msra.mxu0 %v467
      %535 = vmatprep.subr.mxu0 0.0
      %536 = vmatpush1.msra.mxu0 %v468
      %537 = vmatprep.subr.mxu0 0.0
      %538 = vmatpush1.msra.mxu0 %v519
      %539 = vmatprep.subr.mxu0 0.0
      %540 = vmatpush1.msra.mxu0 0.0
      %541 = vmatprep.subr.mxu0 0.0
      %542 = vmatpush1.msra.mxu0 0.0
      %543 = vmatprep.subr.mxu0 0.0
      %544 = vmatpush1.msra.mxu0 0.0
      %545 = vmatprep.subr.mxu0 0.0
      %546 = vmatpush1.msra.mxu0 0.0
      %547 = vmatprep.subr.mxu0 0.0
      %548 = vmatpush1.msra.mxu0 0.0
      %549 = vmatprep.subr.mxu0 0.0
      %550 = vmatpush1.msra.mxu0 0.0
      %551 = vmatprep.subr.mxu0 0.0
      %552 = vmatpush1.msra.mxu0 0.0
      %553 = vmatprep.subr.mxu0 0.0
      %554 = vmatpush1.msra.mxu0 0.0
      %555 = vmatprep.subr.mxu0 0.0
      %556 = vmatpush1.msra.mxu0 0.0
      %557 = vmatprep.subr.mxu0 0.0
      %558 = vmatpush1.msra.mxu0 0.0
      %559 = vmatprep.subr.mxu0 0.0
      %560 = vmatpush1.msra.mxu0 0.0
      %561 = vmatprep.subr.mxu0 0.0
      %562 = vmatpush1.msra.mxu0 0.0
      %563 = vmatprep.subr.mxu0 0.0
      %564 = vmatpush1.msra.mxu0 0.0
      %565 = vmatprep.subr.mxu0 0.0
      %566 = vmatpush1.msra.mxu0 0.0
      %567 = vmatprep.subr.mxu0 0.0
      %568 = vmatpush1.msra.mxu0 0.0
      %569 = vmatprep.subr.mxu0 0.0
      %570 = vmatpush1.msra.mxu0 0.0
      %571 = vmatprep.subr.mxu0 0.0
      %572 = vmatpush1.msra.mxu0 0.0
      %573 = vmatprep.subr.mxu0 0.0
      %574 = vmatpush1.msra.mxu0 0.0
      %575 = vmatprep.subr.mxu0 0.0
      %576 = vmatpush1.msra.mxu0 0.0
      %577 = vmatprep.subr.mxu0 0.0
      %578 = vmatpush1.msra.mxu0 0.0
      %579 = vmatprep.subr.mxu0 0.0
      %580 = vmatpush1.msra.mxu0 0.0
      %581 = vmatprep.subr.mxu0 0.0
      %582 = vmatpush1.msra.mxu0 0.0
      %583 = vmatprep.subr.mxu0 0.0
      %584 = vmatpush1.msra.mxu0 0.0
      %585 = vmatprep.mubr.f32.mxu0 0.0
      %586 = vmatmul.mubr.f32.gmra.mrb[0].mxu0 %v471
      %v587 = vpop.f32.mrb[0].mxu0
      %v588 = vadd.f32 0.0, %v587
      %v589 = vpop.f32.mrb[0].mxu0
      %590 = vmatprep.mubr.f32.mxu0 0.0
      %591 = vmatmul.mubr.f32.gmra.mrb[0].mxu0 %v474
      %v592 = vpop.f32.mrb[0].mxu0
      %v593 = vadd.f32 0.0, %v592
      %v594 = vpop.f32.mrb[0].mxu0
      %595 = vmatprep.mubr.f32.mxu0 0.0
      %596 = vmatmul.mubr.f32.gmra.mrb[0].mxu0 %v477
      %v597 = vpop.f32.mrb[0].mxu0
      %v598 = vadd.f32 0.0, %v597
      %v599 = vpop.f32.mrb[0].mxu0
      %600 = vmatprep.mubr.f32.mxu0 0.0
      %601 = vmatmul.mubr.f32.gmra.mrb[0].mxu0 %v480
      %v602 = vpop.f32.mrb[0].mxu0
      %v603 = vadd.f32 0.0, %v602
      %v604 = vpop.f32.mrb[0].mxu0
      %605 = vmatprep.mubr.f32.mxu0 0.0
      %606 = vmatmul.mubr.f32.gmra.mrb[0].mxu0 %v483
      %v607 = vpop.f32.mrb[0].mxu0
      %v608 = vadd.f32 0.0, %v607
      %v609 = vpop.f32.mrb[0].mxu0
      %610 = vmatprep.mubr.f32.mxu0 0.0
      %611 = vmatmul.mubr.f32.gmra.mrb[0].mxu0 %v486
      %v612 = vpop.f32.mrb[0].mxu0
      %v613 = vadd.f32 0.0, %v612
      %v614 = vpop.f32.mrb[0].mxu0
      %615 = vmatprep.mubr.f32.mxu0 0.0
      %616 = vmatmul.mubr.f32.gmra.mrb[0].mxu0 %v489
      %v617 = vpop.f32.mrb[0].mxu0
      %v618 = vadd.f32 0.0, %v617
      %v619 = vpop.f32.mrb[0].mxu0
      %620 = vmatprep.mubr.f32.mxu0 0.0
      %621 = vmatmul.mubr.f32.gmra.mrb[0].mxu0 %v492
      %v622 = vpop.f32.mrb[0].mxu0
      %v623 = vadd.f32 0.0, %v622
      %v624 = vpop.f32.mrb[0].mxu0
      %625 = vmatprep.mubr.f32.mxu0 0.0
      %626 = vmatmul.mubr.f32.gmra.mrb[0].mxu0 %v495
      %v627 = vpop.f32.mrb[0].mxu0
      %v628 = vadd.f32 0.0, %v627
      %v629 = vpop.f32.mrb[0].mxu0
      %630 = vmatprep.mubr.f32.mxu0 0.0
      %631 = vmatmul.mubr.f32.gmra.mrb[0].mxu0 %v498
      %v632 = vpop.f32.mrb[0].mxu0
      %v633 = vadd.f32 0.0, %v632
      %v634 = vpop.f32.mrb[0].mxu0
      %635 = vmatprep.mubr.f32.mxu0 0.0
      %636 = vmatmul.mubr.f32.gmra.mrb[0].mxu0 %v501
      %v637 = vpop.f32.mrb[0].mxu0
      %v638 = vadd.f32 0.0, %v637
      %v639 = vpop.f32.mrb[0].mxu0
      %640 = vmatprep.mubr.f32.mxu0 0.0
      %641 = vmatmul.mubr.f32.gmra.mrb[0].mxu0 %v504
      %v642 = vpop.f32.mrb[0].mxu0
      %v643 = vadd.f32 0.0, %v642
      %v644 = vpop.f32.mrb[0].mxu0
      %645 = vmatprep.mubr.f32.mxu0 0.0
      %646 = vmatmul.mubr.f32.gmra.mrb[0].mxu0 %v507
      %v647 = vpop.f32.mrb[0].mxu0
      %v648 = vadd.f32 0.0, %v647
      %v649 = vpop.f32.mrb[0].mxu0
      %650 = vmatprep.mubr.f32.mxu0 0.0
      %651 = vmatmul.mubr.f32.gmra.mrb[0].mxu0 %v510
      %v652 = vpop.f32.mrb[0].mxu0
      %v653 = vadd.f32 0.0, %v652
      %v654 = vpop.f32.mrb[0].mxu0
      %655 = vmatprep.mubr.f32.mxu0 0.0
      %656 = vmatmul.mubr.f32.gmra.mrb[0].mxu0 %v513
      %v657 = vpop.f32.mrb[0].mxu0
      %v658 = vadd.f32 0.0, %v657
      %v659 = vpop.f32.mrb[0].mxu0
      %660 = vmatprep.mubr.f32.mxu0 0.0
      %661 = vmatmul.mubr.f32.gmra.mrb[0].mxu0 %v516
      %v662 = vpop.f32.mrb[0].mxu0
      %v663 = vadd.f32 0.0, %v662
      %v664 = vpop.f32.mrb[0].mxu0
      %665 = vdwg.mxu0
      %674 = vrot.lane.b32.xlu0 %v461, 124
      %v675 = vpop.permute.xlu0 %674
      %676 = vrot.lane.b32.xlu0 %v462, 124
      %v677 = vpop.permute.xlu0 %676
      %678 = vrot.lane.b32.xlu0 %v463, 124
      %v679 = vpop.permute.xlu0 %678
      %680 = vrot.lane.b32.xlu0 %v464, 124
      %v681 = vpop.permute.xlu0 %680
      %682 = vrot.lane.b32.xlu0 %v465, 124
      %v683 = vpop.permute.xlu0 %682
      %684 = vrot.lane.b32.xlu0 %v466, 124
      %v685 = vpop.permute.xlu0 %684
      %686 = vrot.lane.b32.xlu0 %v467, 124
      %v687 = vpop.permute.xlu0 %686
      %688 = vrot.lane.b32.xlu0 %v468, 124
      %v689 = vpop.permute.xlu0 %688
      %690 = vrot.lane.b32.xlu0 %v469, 124
      %v691 = vpop.permute.xlu0 %690
      %v700 = vsel %vm248, %v691, 0
      %702 = vmatprep.subr.mxu0 0.0
      %703 = vmatpush1.msra.mxu0 %v675
      %704 = vmatprep.subr.mxu0 0.0
      %705 = vmatpush1.msra.mxu0 %v677
      %706 = vmatprep.subr.mxu0 0.0
      %707 = vmatpush1.msra.mxu0 %v679
      %708 = vmatprep.subr.mxu0 0.0
      %709 = vmatpush1.msra.mxu0 %v681
      %710 = vmatprep.subr.mxu0 0.0
      %711 = vmatpush1.msra.mxu0 %v683
      %712 = vmatprep.subr.mxu0 0.0
      %713 = vmatpush1.msra.mxu0 %v685
      %714 = vmatprep.subr.mxu0 0.0
      %715 = vmatpush1.msra.mxu0 %v687
      %716 = vmatprep.subr.mxu0 0.0
      %717 = vmatpush1.msra.mxu0 %v689
      %718 = vmatprep.subr.mxu0 0.0
      %719 = vmatpush1.msra.mxu0 %v700
      %720 = vmatprep.subr.mxu0 0.0
      %721 = vmatpush1.msra.mxu0 0.0
      %722 = vmatprep.subr.mxu0 0.0
      %723 = vmatpush1.msra.mxu0 0.0
      %724 = vmatprep.subr.mxu0 0.0
      %725 = vmatpush1.msra.mxu0 0.0
      %726 = vmatprep.subr.mxu0 0.0
      %727 = vmatpush1.msra.mxu0 0.0
      %728 = vmatprep.subr.mxu0 0.0
      %729 = vmatpush1.msra.mxu0 0.0
      %730 = vmatprep.subr.mxu0 0.0
      %731 = vmatpush1.msra.mxu0 0.0
      %732 = vmatprep.subr.mxu0 0.0
      %733 = vmatpush1.msra.mxu0 0.0
      %734 = vmatprep.subr.mxu0 0.0
      %735 = vmatpush1.msra.mxu0 0.0
      %736 = vmatprep.subr.mxu0 0.0
      %737 = vmatpush1.msra.mxu0 0.0
      %738 = vmatprep.subr.mxu0 0.0
      %739 = vmatpush1.msra.mxu0 0.0
      %740 = vmatprep.subr.mxu0 0.0
      %741 = vmatpush1.msra.mxu0 0.0
      %742 = vmatprep.subr.mxu0 0.0
      %743 = vmatpush1.msra.mxu0 0.0
      %744 = vmatprep.subr.mxu0 0.0
      %745 = vmatpush1.msra.mxu0 0.0
      %746 = vmatprep.subr.mxu0 0.0
      %747 = vmatpush1.msra.mxu0 0.0
      %748 = vmatprep.subr.mxu0 0.0
      %749 = vmatpush1.msra.mxu0 0.0
      %750 = vmatprep.subr.mxu0 0.0
      %751 = vmatpush1.msra.mxu0 0.0
      %752 = vmatprep.subr.mxu0 0.0
      %753 = vmatpush1.msra.mxu0 0.0
      %754 = vmatprep.subr.mxu0 0.0
      %755 = vmatpush1.msra.mxu0 0.0
      %756 = vmatprep.subr.mxu0 0.0
      %757 = vmatpush1.msra.mxu0 0.0
      %758 = vmatprep.subr.mxu0 0.0
      %759 = vmatpush1.msra.mxu0 0.0
      %760 = vmatprep.subr.mxu0 0.0
      %761 = vmatpush1.msra.mxu0 0.0
      %762 = vmatprep.subr.mxu0 0.0
      %763 = vmatpush1.msra.mxu0 0.0
      %764 = vmatprep.subr.mxu0 0.0
      %765 = vmatpush1.msra.mxu0 0.0
      %766 = vmatprep.mubr.f32.mxu0 0.0
      %767 = vmatmul.mubr.f32.gmra.mrb[0].mxu0 %v471
      %v768 = vpop.f32.mrb[0].mxu0
      %v769 = vadd.f32 0.0, %v768
      %v770 = vpop.f32.mrb[0].mxu0
      %771 = vmatprep.mubr.f32.mxu0 0.0
      %772 = vmatmul.mubr.f32.gmra.mrb[0].mxu0 %v474
      %v773 = vpop.f32.mrb[0].mxu0
      %v774 = vadd.f32 0.0, %v773
      %v775 = vpop.f32.mrb[0].mxu0
      %776 = vmatprep.mubr.f32.mxu0 0.0
      %777 = vmatmul.mubr.f32.gmra.mrb[0].mxu0 %v477
      %v778 = vpop.f32.mrb[0].mxu0
      %v779 = vadd.f32 0.0, %v778
      %v780 = vpop.f32.mrb[0].mxu0
      %781 = vmatprep.mubr.f32.mxu0 0.0
      %782 = vmatmul.mubr.f32.gmra.mrb[0].mxu0 %v480
      %v783 = vpop.f32.mrb[0].mxu0
      %v784 = vadd.f32 0.0, %v783
      %v785 = vpop.f32.mrb[0].mxu0
      %786 = vmatprep.mubr.f32.mxu0 0.0
      %787 = vmatmul.mubr.f32.gmra.mrb[0].mxu0 %v483
      %v788 = vpop.f32.mrb[0].mxu0
      %v789 = vadd.f32 0.0, %v788
      %v790 = vpop.f32.mrb[0].mxu0
      %791 = vmatprep.mubr.f32.mxu0 0.0
      %792 = vmatmul.mubr.f32.gmra.mrb[0].mxu0 %v486
      %v793 = vpop.f32.mrb[0].mxu0
      %v794 = vadd.f32 0.0, %v793
      %v795 = vpop.f32.mrb[0].mxu0
      %796 = vmatprep.mubr.f32.mxu0 0.0
      %797 = vmatmul.mubr.f32.gmra.mrb[0].mxu0 %v489
      %v798 = vpop.f32.mrb[0].mxu0
      %v799 = vadd.f32 0.0, %v798
      %v800 = vpop.f32.mrb[0].mxu0
      %801 = vmatprep.mubr.f32.mxu0 0.0
      %802 = vmatmul.mubr.f32.gmra.mrb[0].mxu0 %v492
      %v803 = vpop.f32.mrb[0].mxu0
      %v804 = vadd.f32 0.0, %v803
      %v805 = vpop.f32.mrb[0].mxu0
      %806 = vmatprep.mubr.f32.mxu0 0.0
      %807 = vmatmul.mubr.f32.gmra.mrb[0].mxu0 %v495
      %v808 = vpop.f32.mrb[0].mxu0
      %v809 = vadd.f32 0.0, %v808
      %v810 = vpop.f32.mrb[0].mxu0
      %811 = vmatprep.mubr.f32.mxu0 0.0
      %812 = vmatmul.mubr.f32.gmra.mrb[0].mxu0 %v498
      %v813 = vpop.f32.mrb[0].mxu0
      %v814 = vadd.f32 0.0, %v813
      %v815 = vpop.f32.mrb[0].mxu0
      %816 = vmatprep.mubr.f32.mxu0 0.0
      %817 = vmatmul.mubr.f32.gmra.mrb[0].mxu0 %v501
      %v818 = vpop.f32.mrb[0].mxu0
      %v819 = vadd.f32 0.0, %v818
      %v820 = vpop.f32.mrb[0].mxu0
      %821 = vmatprep.mubr.f32.mxu0 0.0
      %822 = vmatmul.mubr.f32.gmra.mrb[0].mxu0 %v504
      %v823 = vpop.f32.mrb[0].mxu0
      %v824 = vadd.f32 0.0, %v823
      %v825 = vpop.f32.mrb[0].mxu0
      %826 = vmatprep.mubr.f32.mxu0 0.0
      %827 = vmatmul.mubr.f32.gmra.mrb[0].mxu0 %v507
      %v828 = vpop.f32.mrb[0].mxu0
      %v829 = vadd.f32 0.0, %v828
      %v830 = vpop.f32.mrb[0].mxu0
      %831 = vmatprep.mubr.f32.mxu0 0.0
      %832 = vmatmul.mubr.f32.gmra.mrb[0].mxu0 %v510
      %v833 = vpop.f32.mrb[0].mxu0
      %v834 = vadd.f32 0.0, %v833
      %v835 = vpop.f32.mrb[0].mxu0
      %836 = vmatprep.mubr.f32.mxu0 0.0
      %837 = vmatmul.mubr.f32.gmra.mrb[0].mxu0 %v513
      %v838 = vpop.f32.mrb[0].mxu0
      %v839 = vadd.f32 0.0, %v838
      %v840 = vpop.f32.mrb[0].mxu0
      %841 = vmatprep.mubr.f32.mxu0 0.0
      %842 = vmatmul.mubr.f32.gmra.mrb[0].mxu0 %v516
      %v843 = vpop.f32.mrb[0].mxu0
      %v844 = vadd.f32 0.0, %v843
      %v845 = vpop.f32.mrb[0].mxu0
      %846 = vdwg.mxu0
      %v847 = vrcp.pop %v769
      %v848 = vmul.f32 %v588, %v847
      %v849 = vrcp.pop %v774
      %v850 = vmul.f32 %v593, %v849
      %v851 = vrcp.pop %v779
      %v852 = vmul.f32 %v598, %v851
      %v853 = vrcp.pop %v784
      %v854 = vmul.f32 %v603, %v853
      %v855 = vrcp.pop %v789
      %v856 = vmul.f32 %v608, %v855
      %v857 = vrcp.pop %v794
      %v858 = vmul.f32 %v613, %v857
      %v859 = vrcp.pop %v799
      %v860 = vmul.f32 %v618, %v859
      %v861 = vrcp.pop %v804
      %v862 = vmul.f32 %v623, %v861
      %v863 = vrcp.pop %v809
      %v864 = vmul.f32 %v628, %v863
      %v865 = vrcp.pop %v814
      %v866 = vmul.f32 %v633, %v865
      %v867 = vrcp.pop %v819
      %v868 = vmul.f32 %v638, %v867
      %v869 = vrcp.pop %v824
      %v870 = vmul.f32 %v643, %v869
      %v871 = vrcp.pop %v829
      %v872 = vmul.f32 %v648, %v871
      %v873 = vrcp.pop %v834
      %v874 = vmul.f32 %v653, %v873
      %v875 = vrcp.pop %v839
      %v876 = vmul.f32 %v658, %v875
      %v877 = vrcp.pop %v844
      %v878 = vmul.f32 %v663, %v877
      %vm879 = vcmask 31744
      %880 = vst.msk [vmem:[%s172] sm:$0xff] %vm879, %v848
      %881 = vst.msk [vmem:[%s172 + $0x8] sm:$0xff] %vm879, %v850
      %882 = vst.msk [vmem:[%s172 + $0x10] sm:$0xff] %vm879, %v852
      %883 = vst.msk [vmem:[%s172 + $0x18] sm:$0xff] %vm879, %v854
      %884 = vst.msk [vmem:[%s172 + $0x20] sm:$0xff] %vm879, %v856
      %885 = vst.msk [vmem:[%s172 + $0x28] sm:$0xff] %vm879, %v858
      %886 = vst.msk [vmem:[%s172 + $0x30] sm:$0xff] %vm879, %v860
      %887 = vst.msk [vmem:[%s172 + $0x38] sm:$0xff] %vm879, %v862
      %888 = vst.msk [vmem:[%s172 + $0x40] sm:$0xff] %vm879, %v864
      %889 = vst.msk [vmem:[%s172 + $0x48] sm:$0xff] %vm879, %v866
      %890 = vst.msk [vmem:[%s172 + $0x50] sm:$0xff] %vm879, %v868
      %891 = vst.msk [vmem:[%s172 + $0x58] sm:$0xff] %vm879, %v870
      %892 = vst.msk [vmem:[%s172 + $0x60] sm:$0xff] %vm879, %v872
      %893 = vst.msk [vmem:[%s172 + $0x68] sm:$0xff] %vm879, %v874
      %894 = vst.msk [vmem:[%s172 + $0x70] sm:$0xff] %vm879, %v876
      %895 = vst.msk [vmem:[%s172 + $0x78] sm:$0xff] %vm879, %v878
      %s896 = smul.u32 16, %s14
      %p897 = scmp.lt.s32.totalorder %s896, 31
      %s898 = scalar_select %p897, %s896, 31
      %s899 = smul.addr %s898, 8
      %s900 = scalar_lea.vmem %s3, %s899
      // Predicated region
      $region33: #{tpu_custom_call.1} parent=31 // pred_check
        %p901 = pneg %p100
      $region34: #{tpu_custom_call.1} parent=31 // pred_check_branch
        %903 = sbr.rel (%p901) target = $region36
      $region35: #{tpu_custom_call.1} parent=31 // pred_region
        %s904 = smul.u32 16, %s14
      $region36: #{tpu_custom_call.1} parent=31 // pred_fallthru
        _
    $region32: #{tpu_custom_call.1} parent=5 // pred_fallthru
      _
    %p905 = scmp.le.s32.totalorder 2, %s9
    // Predicated region
    $region37: #{tpu_custom_call.1} parent=5 // pred_check
      %p906 = pneg %p905
    $region38: #{tpu_custom_call.1} parent=5 // pred_check_branch
      %908 = sbr.rel (%p906) target = $region40
    $region39: #{tpu_custom_call.1} parent=5 // pred_region
      %s909 = ssub.s32 %s9, 2
      // Predicated region
      $region41: #{tpu_custom_call.1} parent=39 // pred_check
        %p910 = pneg %p106
      $region42: #{tpu_custom_call.1} parent=39 // pred_check_branch
        %912 = sbr.rel (%p910) target = $region44
      $region43: #{tpu_custom_call.1} parent=39 // pred_region
        %s913 = smul.u32 16, %s15
        %p914 = scmp.lt.s32.totalorder %s913, 31
        %s915 = scalar_select %p914, %s913, 31
        %s916 = smul.addr %s915, 8
        %s917 = scalar_lea.vmem %s3, %s916
      $region44: #{tpu_custom_call.1} parent=39 // pred_fallthru
        _
    $region40: #{tpu_custom_call.1} parent=5 // pred_fallthru
      _
  $region6: #{tpu_custom_call.1} parent=0 // loop_footer
    %s13 = sadd.s32 1, %s9
  $region7: #{tpu_custom_call.1} parent=0 // loop_footer_branch
    %8 = sbr.rel target = $region3
  $region8: #{tpu_custom_call.1} parent=0 // loop_exit
    _

</llo_original>
